<compile_context>
chip_gen: v7x
topology: tpu7x:2x2x1
jax: 0.10.0
libtpu: 0.0.40
codegen_flags: <defaults>
</compile_context>

<pallas_src>
import functools

import jax
import jax.numpy as jnp
from jax.experimental import pallas as pl
from jax.experimental.pallas import tpu as pltpu


_LANE = 1024           # lane-dense width: multiple of 128
_MAX_TILE_ROWS = 512   # 512 * 1024 * 4B = 2 MiB per tile buffer

# murmur3 / golden-ratio constants expressed as signed 32-bit values
# (int32 wrap-around arithmetic is bit-identical to uint32 mod 2**32).
_GOLDEN = -1640531527    # 0x9E3779B9
_MURMUR1 = -2048144789   # 0x85EBCA6B
_MURMUR2 = -1028477387   # 0xC2B2AE35


def _round_up(a, b):
    return ((a + b - 1) // b) * b


def _srl(x, n):
    """Logical right shift of int32 bits (arithmetic shift + mask)."""
    return (x >> n) & ((1 << (32 - n)) - 1)


def _fmix32(h):
    """murmur3 finalizer on int32 (bit-exact vs. the uint32 reference)."""
    h = h ^ _srl(h, 16)
    h = h * _MURMUR1
    h = h ^ _srl(h, 13)
    h = h * _MURMUR2
    h = h ^ _srl(h, 16)
    return h


def _inv_normal_cdf(p):
    """Acklam's rational approximation of the standard normal inverse CDF.

    Max abs error ~1e-9; uses only log/sqrt/polynomials/select (one division).
    """
    a1, a2, a3 = -3.969683028665376e+01, 2.209460984245205e+02, -2.759285104469687e+02
    a4, a5, a6 = 1.383577518672690e+02, -3.066479806614716e+01, 2.506628277459239e+00
    b1, b2, b3 = -5.447609879822406e+01, 1.615858368580409e+02, -1.556989798598866e+02
    b4, b5 = 6.680131188771972e+01, -1.328068155288572e+01
    c1, c2, c3 = -7.784894002430293e-03, -3.223964580411365e-01, -2.400758277161838e+00
    c4, c5, c6 = -2.549732539343734e+00, 4.374664141464968e+00, 2.938163982698783e+00
    d1, d2 = 7.784695709041462e-03, 3.224671290700398e-01
    d3, d4 = 2.445134137142996e+00, 3.754408661907416e+00
    p_low = 0.02425

    q = p - 0.5

    # central region
    r = q * q
    num_c = (((((a1 * r + a2) * r + a3) * r + a4) * r + a5) * r + a6) * q
    den_c = ((((b1 * r + b2) * r + b3) * r + b4) * r + b5) * r + 1.0

    # tails, folded by symmetry so only one log + one sqrt is needed
    pt = jnp.minimum(p, 1.0 - p)
    s = jnp.sqrt(-2.0 * jnp.log(pt))
    num_t = ((((c1 * s + c2) * s + c3) * s + c4) * s + c5) * s + c6
    den_t = (((d1 * s + d2) * s + d3) * s + d4) * s + 1.0
    num_t = jnp.where(q < 0.0, num_t, -num_t)

    tail = pt < p_low
    num = jnp.where(tail, num_t, num_c)
    den = jnp.where(tail, den_t, den_c)
    return num / den


def _gaussian_noise_kernel(seed_ref, x_ref, o_ref, *, sigma, tile_rows, lane):
    shape = x_ref.shape  # (tile_rows, lane)

    # ---- global element index of each element of this tile -----------------
    row = jax.lax.broadcasted_iota(jnp.int32, shape, 0)
    col = jax.lax.broadcasted_iota(jnp.int32, shape, 1)
    g_row = pl.program_id(0) * tile_rows + row
    idx = g_row * lane + col  # wraps for >2^31 elements: fine for hashing

    # ---- counter-based PRNG: 2 rounds of murmur3 fmix32, seeded ------------
    seed = seed_ref[0]
    h = _fmix32(idx ^ (seed * _GOLDEN))
    h = _fmix32(h + _GOLDEN)

    # 23 random bits -> uniform in the open interval (0, 1)
    bits = _srl(h, 9)
    u = (bits.astype(jnp.float32) + 0.5) * (1.0 / 8388608.0)

    # ---- uniform -> standard normal ----------------------------------------
    noise = _inv_normal_cdf(u)

    # ---- relative gaussian noise + clip to [0, 1] ---------------------------
    xf = x_ref[...].astype(jnp.float32)
    y = xf * (1.0 + sigma * noise)          # == x + noise * (sigma * x)
    y = jnp.clip(y, 0.0, 1.0)
    o_ref[...] = y.astype(o_ref.dtype)


def gaussian_noise(x, seed, *, sigma=0.1, training=True):
    """Forward pass of GaussianNoise. x: any-shaped float array, seed: int."""
    if (not training) or sigma == 0:
        return x

    orig_shape = x.shape
    total = x.size

    # lane-dense slab: rows multiple of 8 (sublane), width multiple of 128 (lane)
    rows = _round_up(pl.cdiv(total, _LANE), 8)
    tile_rows = min(_MAX_TILE_ROWS, rows)
    rows = _round_up(rows, tile_rows)
    padded = rows * _LANE
    grid = rows // tile_rows

    x_flat = x.reshape(-1)
    if padded != total:
        x_flat = jnp.pad(x_flat, (0, padded - total))
    x2 = x_flat.reshape(rows, _LANE)

    seed_arr = jnp.asarray([seed], dtype=jnp.int32)
    kernel = functools.partial(
        _gaussian_noise_kernel, sigma=float(sigma), tile_rows=tile_rows, lane=_LANE
    )

    out2 = pl.pallas_call(
        kernel,
        out_shape=jax.ShapeDtypeStruct((rows, _LANE), x.dtype),
        grid_spec=pltpu.PrefetchScalarGridSpec(
            num_scalar_prefetch=1,
            grid=(grid,),
            in_specs=[pl.BlockSpec((tile_rows, _LANE), lambda i, seed: (i, 0))],
            out_specs=pl.BlockSpec((tile_rows, _LANE), lambda i, seed: (i, 0)),
        ),
        compiler_params=pltpu.CompilerParams(
            dimension_semantics=("parallel",),
            vmem_limit_bytes=32 * 1024 * 1024,
        ),
    )(seed_arr, x2)

    return out2.reshape(-1)[:total].reshape(orig_shape)


if __name__ == "__main__":
    key = jax.random.PRNGKey(0)
    # Small NCHW input; values in [0, 1) like typical normalized activations.
    x = jax.random.uniform(key, (2, 4, 16, 16), dtype=jnp.float32)

    sigma = 0.1
    y = jax.block_until_ready(gaussian_noise(x, seed=0, sigma=sigma, training=True))

    # Shape/dtype preserved, output clipped to [0, 1].
    assert y.shape == x.shape and y.dtype == x.dtype
    assert bool(jnp.all(y >= 0.0)) and bool(jnp.all(y <= 1.0))

    # Statistical sanity: where no clipping occurred, (y - x) / (sigma * x) is
    # exactly the sampled noise and should look standard normal.
    ratio = (y - x) / (sigma * x)
    ok = (y > 0.0) & (y < 1.0) & (x > 1e-4)
    n = jnp.sum(ok)
    mean = jnp.sum(jnp.where(ok, ratio, 0.0)) / n
    var = jnp.sum(jnp.where(ok, (ratio - mean) ** 2, 0.0)) / n
    std = jnp.sqrt(var)
    assert abs(float(mean)) < 0.2, float(mean)
    assert 0.75 < float(std) < 1.25, float(std)

    # Eval mode (or sigma == 0) is identity.
    y_eval = jax.block_until_ready(gaussian_noise(x, seed=0, sigma=sigma, training=False))
    assert bool(jnp.all(y_eval == x))

    print("KERNEL_OK")
</pallas_src>

<mosaic_0001>
module attributes {stable_mosaic.version = 11 : i64} {
  func.func @_gaussian_noise_kernel(%arg0: i32, %arg1: memref<1xi32, #tpu.memory_space<smem>>, %arg2: memref<8x1024xf32, #tpu.memory_space<vmem>>, %arg3: memref<8x1024xf32, #tpu.memory_space<vmem>>) attributes {dimension_semantics = [#tpu.dimension_semantics<parallel>], iteration_bounds = array<i64: 1>, scalar_prefetch = 1 : i64, scratch_operands = 0 : i64, tpu.core_type = #tpu.core_type<tc>, window_params = [{transform_indices = @transform_0, window_bounds = array<i64: 8, 1024>}, {transform_indices = @transform_1, window_bounds = array<i64: 8, 1024>}]} {
    %0 = tpu.iota {dimensions = array<i32: 0>} : vector<8x1024xi32>
    %1 = tpu.iota {dimensions = array<i32: 1>} : vector<8x1024xi32>
    %c8_i32 = arith.constant 8 : i32
    %2 = arith.muli %arg0, %c8_i32 : i32
    %3 = vector.broadcast %2 : i32 to vector<8x1024xi32>
    %4 = arith.addi %3, %0 : vector<8x1024xi32>
    %c1024_i32 = arith.constant 1024 : i32
    %5 = vector.broadcast %c1024_i32 : i32 to vector<8x1024xi32>
    %6 = arith.muli %4, %5 : vector<8x1024xi32>
    %7 = arith.addi %6, %1 : vector<8x1024xi32>
    %c0 = arith.constant 0 : index
    %8 = memref.load %arg1[%c0] : memref<1xi32, #tpu.memory_space<smem>>
    %c-1640531527_i32 = arith.constant -1640531527 : i32
    %9 = arith.muli %8, %c-1640531527_i32 : i32
    %10 = vector.broadcast %9 : i32 to vector<8x1024xi32>
    %11 = arith.xori %7, %10 : vector<8x1024xi32>
    %c16_i32 = arith.constant 16 : i32
    %12 = vector.broadcast %c16_i32 : i32 to vector<8x1024xi32>
    %13 = arith.shrsi %11, %12 : vector<8x1024xi32>
    %c65535_i32 = arith.constant 65535 : i32
    %14 = vector.broadcast %c65535_i32 : i32 to vector<8x1024xi32>
    %15 = arith.andi %13, %14 : vector<8x1024xi32>
    %16 = arith.xori %11, %15 : vector<8x1024xi32>
    %c-2048144789_i32 = arith.constant -2048144789 : i32
    %17 = vector.broadcast %c-2048144789_i32 : i32 to vector<8x1024xi32>
    %18 = arith.muli %16, %17 : vector<8x1024xi32>
    %c13_i32 = arith.constant 13 : i32
    %19 = vector.broadcast %c13_i32 : i32 to vector<8x1024xi32>
    %20 = arith.shrsi %18, %19 : vector<8x1024xi32>
    %c524287_i32 = arith.constant 524287 : i32
    %21 = vector.broadcast %c524287_i32 : i32 to vector<8x1024xi32>
    %22 = arith.andi %20, %21 : vector<8x1024xi32>
    %23 = arith.xori %18, %22 : vector<8x1024xi32>
    %c-1028477387_i32 = arith.constant -1028477387 : i32
    %24 = vector.broadcast %c-1028477387_i32 : i32 to vector<8x1024xi32>
    %25 = arith.muli %23, %24 : vector<8x1024xi32>
    %c16_i32_0 = arith.constant 16 : i32
    %26 = vector.broadcast %c16_i32_0 : i32 to vector<8x1024xi32>
    %27 = arith.shrsi %25, %26 : vector<8x1024xi32>
    %c65535_i32_1 = arith.constant 65535 : i32
    %28 = vector.broadcast %c65535_i32_1 : i32 to vector<8x1024xi32>
    %29 = arith.andi %27, %28 : vector<8x1024xi32>
    %30 = arith.xori %25, %29 : vector<8x1024xi32>
    %c-1640531527_i32_2 = arith.constant -1640531527 : i32
    %31 = vector.broadcast %c-1640531527_i32_2 : i32 to vector<8x1024xi32>
    %32 = arith.addi %30, %31 : vector<8x1024xi32>
    %c16_i32_3 = arith.constant 16 : i32
    %33 = vector.broadcast %c16_i32_3 : i32 to vector<8x1024xi32>
    %34 = arith.shrsi %32, %33 : vector<8x1024xi32>
    %c65535_i32_4 = arith.constant 65535 : i32
    %35 = vector.broadcast %c65535_i32_4 : i32 to vector<8x1024xi32>
    %36 = arith.andi %34, %35 : vector<8x1024xi32>
    %37 = arith.xori %32, %36 : vector<8x1024xi32>
    %c-2048144789_i32_5 = arith.constant -2048144789 : i32
    %38 = vector.broadcast %c-2048144789_i32_5 : i32 to vector<8x1024xi32>
    %39 = arith.muli %37, %38 : vector<8x1024xi32>
    %c13_i32_6 = arith.constant 13 : i32
    %40 = vector.broadcast %c13_i32_6 : i32 to vector<8x1024xi32>
    %41 = arith.shrsi %39, %40 : vector<8x1024xi32>
    %c524287_i32_7 = arith.constant 524287 : i32
    %42 = vector.broadcast %c524287_i32_7 : i32 to vector<8x1024xi32>
    %43 = arith.andi %41, %42 : vector<8x1024xi32>
    %44 = arith.xori %39, %43 : vector<8x1024xi32>
    %c-1028477387_i32_8 = arith.constant -1028477387 : i32
    %45 = vector.broadcast %c-1028477387_i32_8 : i32 to vector<8x1024xi32>
    %46 = arith.muli %44, %45 : vector<8x1024xi32>
    %c16_i32_9 = arith.constant 16 : i32
    %47 = vector.broadcast %c16_i32_9 : i32 to vector<8x1024xi32>
    %48 = arith.shrsi %46, %47 : vector<8x1024xi32>
    %c65535_i32_10 = arith.constant 65535 : i32
    %49 = vector.broadcast %c65535_i32_10 : i32 to vector<8x1024xi32>
    %50 = arith.andi %48, %49 : vector<8x1024xi32>
    %51 = arith.xori %46, %50 : vector<8x1024xi32>
    %c9_i32 = arith.constant 9 : i32
    %52 = vector.broadcast %c9_i32 : i32 to vector<8x1024xi32>
    %53 = arith.shrsi %51, %52 : vector<8x1024xi32>
    %c8388607_i32 = arith.constant 8388607 : i32
    %54 = vector.broadcast %c8388607_i32 : i32 to vector<8x1024xi32>
    %55 = arith.andi %53, %54 : vector<8x1024xi32>
    %56 = arith.sitofp %55 : vector<8x1024xi32> to vector<8x1024xf32>
    %cst = arith.constant 5.000000e-01 : f32
    %57 = vector.broadcast %cst : f32 to vector<8x1024xf32>
    %58 = arith.addf %56, %57 : vector<8x1024xf32>
    %cst_11 = arith.constant 1.1920929E-7 : f32
    %59 = vector.broadcast %cst_11 : f32 to vector<8x1024xf32>
    %60 = arith.mulf %58, %59 : vector<8x1024xf32>
    %cst_12 = arith.constant 5.000000e-01 : f32
    %61 = vector.broadcast %cst_12 : f32 to vector<8x1024xf32>
    %62 = arith.subf %60, %61 : vector<8x1024xf32>
    %63 = arith.mulf %62, %62 : vector<8x1024xf32>
    %cst_13 = arith.constant -39.6968307 : f32
    %64 = vector.broadcast %cst_13 : f32 to vector<8x1024xf32>
    %65 = arith.mulf %64, %63 : vector<8x1024xf32>
    %cst_14 = arith.constant 220.946106 : f32
    %66 = vector.broadcast %cst_14 : f32 to vector<8x1024xf32>
    %67 = arith.addf %65, %66 : vector<8x1024xf32>
    %68 = arith.mulf %67, %63 : vector<8x1024xf32>
    %cst_15 = arith.constant -275.928497 : f32
    %69 = vector.broadcast %cst_15 : f32 to vector<8x1024xf32>
    %70 = arith.addf %68, %69 : vector<8x1024xf32>
    %71 = arith.mulf %70, %63 : vector<8x1024xf32>
    %cst_16 = arith.constant 138.357758 : f32
    %72 = vector.broadcast %cst_16 : f32 to vector<8x1024xf32>
    %73 = arith.addf %71, %72 : vector<8x1024xf32>
    %74 = arith.mulf %73, %63 : vector<8x1024xf32>
    %cst_17 = arith.constant -30.6647987 : f32
    %75 = vector.broadcast %cst_17 : f32 to vector<8x1024xf32>
    %76 = arith.addf %74, %75 : vector<8x1024xf32>
    %77 = arith.mulf %76, %63 : vector<8x1024xf32>
    %cst_18 = arith.constant 2.50662827 : f32
    %78 = vector.broadcast %cst_18 : f32 to vector<8x1024xf32>
    %79 = arith.addf %77, %78 : vector<8x1024xf32>
    %80 = arith.mulf %79, %62 : vector<8x1024xf32>
    %cst_19 = arith.constant -54.4760971 : f32
    %81 = vector.broadcast %cst_19 : f32 to vector<8x1024xf32>
    %82 = arith.mulf %81, %63 : vector<8x1024xf32>
    %cst_20 = arith.constant 161.585831 : f32
    %83 = vector.broadcast %cst_20 : f32 to vector<8x1024xf32>
    %84 = arith.addf %82, %83 : vector<8x1024xf32>
    %85 = arith.mulf %84, %63 : vector<8x1024xf32>
    %cst_21 = arith.constant -155.698975 : f32
    %86 = vector.broadcast %cst_21 : f32 to vector<8x1024xf32>
    %87 = arith.addf %85, %86 : vector<8x1024xf32>
    %88 = arith.mulf %87, %63 : vector<8x1024xf32>
    %cst_22 = arith.constant 66.8013153 : f32
    %89 = vector.broadcast %cst_22 : f32 to vector<8x1024xf32>
    %90 = arith.addf %88, %89 : vector<8x1024xf32>
    %91 = arith.mulf %90, %63 : vector<8x1024xf32>
    %cst_23 = arith.constant -13.2806816 : f32
    %92 = vector.broadcast %cst_23 : f32 to vector<8x1024xf32>
    %93 = arith.addf %91, %92 : vector<8x1024xf32>
    %94 = arith.mulf %93, %63 : vector<8x1024xf32>
    %cst_24 = arith.constant 1.000000e+00 : f32
    %95 = vector.broadcast %cst_24 : f32 to vector<8x1024xf32>
    %96 = arith.addf %94, %95 : vector<8x1024xf32>
    %cst_25 = arith.constant 1.000000e+00 : f32
    %97 = vector.broadcast %cst_25 : f32 to vector<8x1024xf32>
    %98 = arith.subf %97, %60 : vector<8x1024xf32>
    %99 = arith.minimumf %60, %98 : vector<8x1024xf32>
    %100 = math.log %99 : vector<8x1024xf32>
    %cst_26 = arith.constant -2.000000e+00 : f32
    %101 = vector.broadcast %cst_26 : f32 to vector<8x1024xf32>
    %102 = arith.mulf %101, %100 : vector<8x1024xf32>
    %103 = math.sqrt %102 : vector<8x1024xf32>
    %cst_27 = arith.constant -0.0077848942 : f32
    %104 = vector.broadcast %cst_27 : f32 to vector<8x1024xf32>
    %105 = arith.mulf %104, %103 : vector<8x1024xf32>
    %cst_28 = arith.constant -0.322396457 : f32
    %106 = vector.broadcast %cst_28 : f32 to vector<8x1024xf32>
    %107 = arith.addf %105, %106 : vector<8x1024xf32>
    %108 = arith.mulf %107, %103 : vector<8x1024xf32>
    %cst_29 = arith.constant -2.40075827 : f32
    %109 = vector.broadcast %cst_29 : f32 to vector<8x1024xf32>
    %110 = arith.addf %108, %109 : vector<8x1024xf32>
    %111 = arith.mulf %110, %103 : vector<8x1024xf32>
    %cst_30 = arith.constant -2.54973245 : f32
    %112 = vector.broadcast %cst_30 : f32 to vector<8x1024xf32>
    %113 = arith.addf %111, %112 : vector<8x1024xf32>
    %114 = arith.mulf %113, %103 : vector<8x1024xf32>
    %cst_31 = arith.constant 4.37466431 : f32
    %115 = vector.broadcast %cst_31 : f32 to vector<8x1024xf32>
    %116 = arith.addf %114, %115 : vector<8x1024xf32>
    %117 = arith.mulf %116, %103 : vector<8x1024xf32>
    %cst_32 = arith.constant 2.938164 : f32
    %118 = vector.broadcast %cst_32 : f32 to vector<8x1024xf32>
    %119 = arith.addf %117, %118 : vector<8x1024xf32>
    %cst_33 = arith.constant 0.00778469583 : f32
    %120 = vector.broadcast %cst_33 : f32 to vector<8x1024xf32>
    %121 = arith.mulf %120, %103 : vector<8x1024xf32>
    %cst_34 = arith.constant 0.322467119 : f32
    %122 = vector.broadcast %cst_34 : f32 to vector<8x1024xf32>
    %123 = arith.addf %121, %122 : vector<8x1024xf32>
    %124 = arith.mulf %123, %103 : vector<8x1024xf32>
    %cst_35 = arith.constant 2.44513416 : f32
    %125 = vector.broadcast %cst_35 : f32 to vector<8x1024xf32>
    %126 = arith.addf %124, %125 : vector<8x1024xf32>
    %127 = arith.mulf %126, %103 : vector<8x1024xf32>
    %cst_36 = arith.constant 3.7544086 : f32
    %128 = vector.broadcast %cst_36 : f32 to vector<8x1024xf32>
    %129 = arith.addf %127, %128 : vector<8x1024xf32>
    %130 = arith.mulf %129, %103 : vector<8x1024xf32>
    %cst_37 = arith.constant 1.000000e+00 : f32
    %131 = vector.broadcast %cst_37 : f32 to vector<8x1024xf32>
    %132 = arith.addf %130, %131 : vector<8x1024xf32>
    %cst_38 = arith.constant 0.000000e+00 : f32
    %133 = vector.broadcast %cst_38 : f32 to vector<8x1024xf32>
    %134 = arith.cmpf olt, %62, %133 : vector<8x1024xf32>
    %cst_39 = arith.constant 0.000000e+00 : f32
    %135 = vector.broadcast %cst_39 : f32 to vector<8x1024xf32>
    %136 = arith.subf %135, %119 : vector<8x1024xf32>
    %137 = arith.select %134, %119, %136 : vector<8x1024xi1>, vector<8x1024xf32>
    %cst_40 = arith.constant 2.425000e-02 : f32
    %138 = vector.broadcast %cst_40 : f32 to vector<8x1024xf32>
    %139 = arith.cmpf olt, %99, %138 : vector<8x1024xf32>
    %140 = arith.select %139, %137, %80 : vector<8x1024xi1>, vector<8x1024xf32>
    %141 = arith.select %139, %132, %96 : vector<8x1024xi1>, vector<8x1024xf32>
    %142 = arith.divf %140, %141 : vector<8x1024xf32>
    %c0_41 = arith.constant 0 : index
    %c0_42 = arith.constant 0 : index
    %143 = vector.load %arg2[%c0_41, %c0_42] : memref<8x1024xf32, #tpu.memory_space<vmem>>, vector<8x1024xf32>
    %cst_43 = arith.constant 1.000000e-01 : f32
    %144 = vector.broadcast %cst_43 : f32 to vector<8x1024xf32>
    %145 = arith.mulf %144, %142 : vector<8x1024xf32>
    %cst_44 = arith.constant 1.000000e+00 : f32
    %146 = vector.broadcast %cst_44 : f32 to vector<8x1024xf32>
    %147 = arith.addf %146, %145 : vector<8x1024xf32>
    %148 = arith.mulf %143, %147 : vector<8x1024xf32>
    %cst_45 = arith.constant 0.000000e+00 : f32
    %cst_46 = arith.constant 1.000000e+00 : f32
    %149 = vector.broadcast %cst_45 : f32 to vector<8x1024xf32>
    %150 = arith.maximumf %149, %148 : vector<8x1024xf32>
    %151 = vector.broadcast %cst_46 : f32 to vector<8x1024xf32>
    %152 = arith.minimumf %151, %150 : vector<8x1024xf32>
    %c0_47 = arith.constant 0 : index
    %c0_48 = arith.constant 0 : index
    %153 = vector.load %arg3[%c0_47, %c0_48] : memref<8x1024xf32, #tpu.memory_space<vmem>>, vector<8x1024xf32>
    tpu.vector_store %arg3[%c0_47, %c0_48], %152 {strides = array<i32>} : memref<8x1024xf32, #tpu.memory_space<vmem>>, vector<8x1024xf32>,
    return
  }
  func.func @transform_0(%arg0: i32, %arg1: memref<1xi32, #tpu.memory_space<smem>>) -> (i32, i32) {
    %c0_i32 = arith.constant 0 : i32
    %c0_i32_0 = arith.constant 0 : i32
    return %arg0, %c0_i32 : i32, i32
  }
  func.func @transform_1(%arg0: i32, %arg1: memref<1xi32, #tpu.memory_space<smem>>) -> (i32, i32) {
    %c0_i32 = arith.constant 0 : i32
    %c0_i32_0 = arith.constant 0 : i32
    return %arg0, %c0_i32 : i32, i32
  }
}

</mosaic_0001>

<llo_original>
// kernel: tpu_custom_call.1
$region0: #{tpu_custom_call.1}
  #allocation0 [shape = 'u32[]', space=smem, size = 0x4, offset = 0x4, fixed_abs, tag = 'smem constant byte address 0x4 - core index']
  #allocation1 [shape = 'u32[144,128]{1,0:T(1,128)}', space=vmem, size = 0x12000, scoped, tag = 'internal scratch']
  #allocation2 [shape = 's32[1]{0}', space=sflag, size = 0x4, scoped, tag = 'scoped memory for tpu_custom_call.1']
  #allocation3 [shape = 's32[1]{0:T(128)S(6)}', space=smem, size = 0x200, scoped, tag = 'prefetched SMEM operand 0']
  %s0 = inlined_call_operand.<no memory space> [shape: s32[1], index: 0, kind: input, shape index: {}]
  %s1 = inlined_call_operand.hbm [shape: f32[8,1024], index: 1, kind: input, shape index: {}]
  %s2 = inlined_call_operand.hbm [shape: f32[8,1024], index: 2, kind: output, shape index: {}]
  %s3 = sld [smem:[#allocation0]]
  $region18: #{tpu_custom_call.1} parent=0
    _
  %s5 = ssub.s32 1, %s3
  %s6 = scalar_select 0, %s5, %s3
  %7 = sst [smem:[#allocation3]] %s0
  $region1: #{tpu_custom_call.1} parent=0
    #allocation4 [shape = 'u8[32768]{0}', space=vmem, size = 0x8000, scoped, tag = 'input window, operand 1, single buffered']
    #allocation5 [shape = 's32[1]{0}', space=sflag, size = 0x4, scoped, tag = 'scoped memory for tpu_custom_call.1']
    #allocation6 [shape = 's32[1]{0}', space=sflag, size = 0x4, scoped, tag = 'scoped memory for tpu_custom_call.1']
    #allocation7 [shape = 'u8[32768]{0}', space=vmem, size = 0x8000, scoped, tag = 'output window, operand 0, single buffered']
    %8 = vsyncpa [#allocation5], 0
    %9 = vsyncpa [#allocation6], 0
    // Predicated region
    $region2: #{tpu_custom_call.1} parent=1 // pred_check
      _
    $region3: #{tpu_custom_call.1} parent=1 // pred_check_branch
      %11 = sbr.rel (0) target = $region5
    $region4: #{tpu_custom_call.1} parent=1 // pred_region
      %s13 = ssub.s32 1024, 1024
      %14 = vsyncadd [#allocation5], %s13
      %s16 = sshll.u32 [#allocation4], 4
      %s17 = int_to_ptr.vmem [resolvable:$true] %s16
      %19 = dma.hbm_to_vmem [thread:$0]  %s1, 1024, %s17, [#allocation5]
    $region5: #{tpu_custom_call.1} parent=1 // pred_fallthru
      _
    // Predicated region
    $region6: #{tpu_custom_call.1} parent=1 // pred_check
      _
    $region7: #{tpu_custom_call.1} parent=1 // pred_check_branch
      %21 = sbr.rel (0) target = $region9
    $region8: #{tpu_custom_call.1} parent=1 // pred_region
      %22 = dma.done [#allocation5], 1024
    $region9: #{tpu_custom_call.1} parent=1 // pred_fallthru
      _
    %v23 = vlaneseq
    %v24 = vshrl.u32 %v23, 7
    %v25 = vlaneseq
    %v26 = vand.u32 %v25, 127
    %v27 = vadd.s32 %v26, 128
    %v28 = vadd.s32 %v26, 256
    %v29 = vadd.s32 %v26, 384
    %v30 = vadd.s32 %v26, 512
    %v31 = vadd.s32 %v26, 640
    %v32 = vadd.s32 %v26, 768
    %v33 = vadd.s32 %v26, 896
    %s34 = smul.u32 0, 8
    %v35 = vstv %s34
    %v36 = vadd.s32 %v35, %v24
    %v37 = vmul.u32 %v36, 1024
    %v38 = vadd.s32 %v37, %v26
    %v39 = vadd.s32 %v37, %v27
    %v40 = vadd.s32 %v37, %v28
    %v41 = vadd.s32 %v37, %v29
    %v42 = vadd.s32 %v37, %v30
    %v43 = vadd.s32 %v37, %v31
    %v44 = vadd.s32 %v37, %v32
    %v45 = vadd.s32 %v37, %v33
    %s46 = sld [smem:[#allocation3]]
    %s47 = smul.u32 %s46, 2654435769
    %v48 = vstv %s47
    %v49 = vxor.u32 %v38, %v48
    %v50 = vxor.u32 %v39, %v48
    %v51 = vxor.u32 %v40, %v48
    %v52 = vxor.u32 %v41, %v48
    %v53 = vxor.u32 %v42, %v48
    %v54 = vxor.u32 %v43, %v48
    %v55 = vxor.u32 %v44, %v48
    %v56 = vxor.u32 %v45, %v48
    %v57 = vshra.s32 %v49, 16
    %v58 = vshra.s32 %v50, 16
    %v59 = vshra.s32 %v51, 16
    %v60 = vshra.s32 %v52, 16
    %v61 = vshra.s32 %v53, 16
    %v62 = vshra.s32 %v54, 16
    %v63 = vshra.s32 %v55, 16
    %v64 = vshra.s32 %v56, 16
    %v65 = vand.u32 %v57, 65535
    %v66 = vand.u32 %v58, 65535
    %v67 = vand.u32 %v59, 65535
    %v68 = vand.u32 %v60, 65535
    %v69 = vand.u32 %v61, 65535
    %v70 = vand.u32 %v62, 65535
    %v71 = vand.u32 %v63, 65535
    %v72 = vand.u32 %v64, 65535
    %v73 = vxor.u32 %v49, %v65
    %v74 = vxor.u32 %v50, %v66
    %v75 = vxor.u32 %v51, %v67
    %v76 = vxor.u32 %v52, %v68
    %v77 = vxor.u32 %v53, %v69
    %v78 = vxor.u32 %v54, %v70
    %v79 = vxor.u32 %v55, %v71
    %v80 = vxor.u32 %v56, %v72
    %v81 = vmul.u32 %v73, 2246822507
    %v82 = vmul.u32 %v74, 2246822507
    %v83 = vmul.u32 %v75, 2246822507
    %v84 = vmul.u32 %v76, 2246822507
    %v85 = vmul.u32 %v77, 2246822507
    %v86 = vmul.u32 %v78, 2246822507
    %v87 = vmul.u32 %v79, 2246822507
    %v88 = vmul.u32 %v80, 2246822507
    %v89 = vshra.s32 %v81, 13
    %v90 = vshra.s32 %v82, 13
    %v91 = vshra.s32 %v83, 13
    %v92 = vshra.s32 %v84, 13
    %v93 = vshra.s32 %v85, 13
    %v94 = vshra.s32 %v86, 13
    %v95 = vshra.s32 %v87, 13
    %v96 = vshra.s32 %v88, 13
    %v97 = vand.u32 %v89, 524287
    %v98 = vand.u32 %v90, 524287
    %v99 = vand.u32 %v91, 524287
    %v100 = vand.u32 %v92, 524287
    %v101 = vand.u32 %v93, 524287
    %v102 = vand.u32 %v94, 524287
    %v103 = vand.u32 %v95, 524287
    %v104 = vand.u32 %v96, 524287
    %v105 = vxor.u32 %v81, %v97
    %v106 = vxor.u32 %v82, %v98
    %v107 = vxor.u32 %v83, %v99
    %v108 = vxor.u32 %v84, %v100
    %v109 = vxor.u32 %v85, %v101
    %v110 = vxor.u32 %v86, %v102
    %v111 = vxor.u32 %v87, %v103
    %v112 = vxor.u32 %v88, %v104
    %v113 = vmul.u32 %v105, 3266489909
    %v114 = vmul.u32 %v106, 3266489909
    %v115 = vmul.u32 %v107, 3266489909
    %v116 = vmul.u32 %v108, 3266489909
    %v117 = vmul.u32 %v109, 3266489909
    %v118 = vmul.u32 %v110, 3266489909
    %v119 = vmul.u32 %v111, 3266489909
    %v120 = vmul.u32 %v112, 3266489909
    %v121 = vshra.s32 %v113, 16
    %v122 = vshra.s32 %v114, 16
    %v123 = vshra.s32 %v115, 16
    %v124 = vshra.s32 %v116, 16
    %v125 = vshra.s32 %v117, 16
    %v126 = vshra.s32 %v118, 16
    %v127 = vshra.s32 %v119, 16
    %v128 = vshra.s32 %v120, 16
    %v129 = vand.u32 %v121, 65535
    %v130 = vand.u32 %v122, 65535
    %v131 = vand.u32 %v123, 65535
    %v132 = vand.u32 %v124, 65535
    %v133 = vand.u32 %v125, 65535
    %v134 = vand.u32 %v126, 65535
    %v135 = vand.u32 %v127, 65535
    %v136 = vand.u32 %v128, 65535
    %v137 = vxor.u32 %v113, %v129
    %v138 = vxor.u32 %v114, %v130
    %v139 = vxor.u32 %v115, %v131
    %v140 = vxor.u32 %v116, %v132
    %v141 = vxor.u32 %v117, %v133
    %v142 = vxor.u32 %v118, %v134
    %v143 = vxor.u32 %v119, %v135
    %v144 = vxor.u32 %v120, %v136
    %v145 = vadd.s32 %v137, 2654435769
    %v146 = vadd.s32 %v138, 2654435769
    %v147 = vadd.s32 %v139, 2654435769
    %v148 = vadd.s32 %v140, 2654435769
    %v149 = vadd.s32 %v141, 2654435769
    %v150 = vadd.s32 %v142, 2654435769
    %v151 = vadd.s32 %v143, 2654435769
    %v152 = vadd.s32 %v144, 2654435769
    %v153 = vshra.s32 %v145, 16
    %v154 = vshra.s32 %v146, 16
    %v155 = vshra.s32 %v147, 16
    %v156 = vshra.s32 %v148, 16
    %v157 = vshra.s32 %v149, 16
    %v158 = vshra.s32 %v150, 16
    %v159 = vshra.s32 %v151, 16
    %v160 = vshra.s32 %v152, 16
    %v161 = vand.u32 %v153, 65535
    %v162 = vand.u32 %v154, 65535
    %v163 = vand.u32 %v155, 65535
    %v164 = vand.u32 %v156, 65535
    %v165 = vand.u32 %v157, 65535
    %v166 = vand.u32 %v158, 65535
    %v167 = vand.u32 %v159, 65535
    %v168 = vand.u32 %v160, 65535
    %v169 = vxor.u32 %v145, %v161
    %v170 = vxor.u32 %v146, %v162
    %v171 = vxor.u32 %v147, %v163
    %v172 = vxor.u32 %v148, %v164
    %v173 = vxor.u32 %v149, %v165
    %v174 = vxor.u32 %v150, %v166
    %v175 = vxor.u32 %v151, %v167
    %v176 = vxor.u32 %v152, %v168
    %v177 = vmul.u32 %v169, 2246822507
    %v178 = vmul.u32 %v170, 2246822507
    %v179 = vmul.u32 %v171, 2246822507
    %v180 = vmul.u32 %v172, 2246822507
    %v181 = vmul.u32 %v173, 2246822507
    %v182 = vmul.u32 %v174, 2246822507
    %v183 = vmul.u32 %v175, 2246822507
    %v184 = vmul.u32 %v176, 2246822507
    %v185 = vshra.s32 %v177, 13
    %v186 = vshra.s32 %v178, 13
    %v187 = vshra.s32 %v179, 13
    %v188 = vshra.s32 %v180, 13
    %v189 = vshra.s32 %v181, 13
    %v190 = vshra.s32 %v182, 13
    %v191 = vshra.s32 %v183, 13
    %v192 = vshra.s32 %v184, 13
    %v193 = vand.u32 %v185, 524287
    %v194 = vand.u32 %v186, 524287
    %v195 = vand.u32 %v187, 524287
    %v196 = vand.u32 %v188, 524287
    %v197 = vand.u32 %v189, 524287
    %v198 = vand.u32 %v190, 524287
    %v199 = vand.u32 %v191, 524287
    %v200 = vand.u32 %v192, 524287
    %v201 = vxor.u32 %v177, %v193
    %v202 = vxor.u32 %v178, %v194
    %v203 = vxor.u32 %v179, %v195
    %v204 = vxor.u32 %v180, %v196
    %v205 = vxor.u32 %v181, %v197
    %v206 = vxor.u32 %v182, %v198
    %v207 = vxor.u32 %v183, %v199
    %v208 = vxor.u32 %v184, %v200
    %v209 = vmul.u32 %v201, 3266489909
    %v210 = vmul.u32 %v202, 3266489909
    %v211 = vmul.u32 %v203, 3266489909
    %v212 = vmul.u32 %v204, 3266489909
    %v213 = vmul.u32 %v205, 3266489909
    %v214 = vmul.u32 %v206, 3266489909
    %v215 = vmul.u32 %v207, 3266489909
    %v216 = vmul.u32 %v208, 3266489909
    %v217 = vshra.s32 %v209, 16
    %v218 = vshra.s32 %v210, 16
    %v219 = vshra.s32 %v211, 16
    %v220 = vshra.s32 %v212, 16
    %v221 = vshra.s32 %v213, 16
    %v222 = vshra.s32 %v214, 16
    %v223 = vshra.s32 %v215, 16
    %v224 = vshra.s32 %v216, 16
    %v225 = vand.u32 %v217, 65535
    %v226 = vand.u32 %v218, 65535
    %v227 = vand.u32 %v219, 65535
    %v228 = vand.u32 %v220, 65535
    %v229 = vand.u32 %v221, 65535
    %v230 = vand.u32 %v222, 65535
    %v231 = vand.u32 %v223, 65535
    %v232 = vand.u32 %v224, 65535
    %v233 = vxor.u32 %v209, %v225
    %v234 = vxor.u32 %v210, %v226
    %v235 = vxor.u32 %v211, %v227
    %v236 = vxor.u32 %v212, %v228
    %v237 = vxor.u32 %v213, %v229
    %v238 = vxor.u32 %v214, %v230
    %v239 = vxor.u32 %v215, %v231
    %v240 = vxor.u32 %v216, %v232
    %v241 = vshra.s32 %v233, 9
    %v242 = vshra.s32 %v234, 9
    %v243 = vshra.s32 %v235, 9
    %v244 = vshra.s32 %v236, 9
    %v245 = vshra.s32 %v237, 9
    %v246 = vshra.s32 %v238, 9
    %v247 = vshra.s32 %v239, 9
    %v248 = vshra.s32 %v240, 9
    %v249 = vand.u32 %v241, 8388607
    %v250 = vand.u32 %v242, 8388607
    %v251 = vand.u32 %v243, 8388607
    %v252 = vand.u32 %v244, 8388607
    %v253 = vand.u32 %v245, 8388607
    %v254 = vand.u32 %v246, 8388607
    %v255 = vand.u32 %v247, 8388607
    %v256 = vand.u32 %v248, 8388607
    %v257 = vcvt.s32.f32 %v249
    %v258 = vcvt.s32.f32 %v250
    %v259 = vcvt.s32.f32 %v251
    %v260 = vcvt.s32.f32 %v252
    %v261 = vcvt.s32.f32 %v253
    %v262 = vcvt.s32.f32 %v254
    %v263 = vcvt.s32.f32 %v255
    %v264 = vcvt.s32.f32 %v256
    %v265 = vadd.f32 %v257, 0.5
    %v266 = vadd.f32 %v258, 0.5
    %v267 = vadd.f32 %v259, 0.5
    %v268 = vadd.f32 %v260, 0.5
    %v269 = vadd.f32 %v261, 0.5
    %v270 = vadd.f32 %v262, 0.5
    %v271 = vadd.f32 %v263, 0.5
    %v272 = vadd.f32 %v264, 0.5
    %v273 = vmul.f32 %v265, 1.1920929e-07
    %v274 = vmul.f32 %v266, 1.1920929e-07
    %v275 = vmul.f32 %v267, 1.1920929e-07
    %v276 = vmul.f32 %v268, 1.1920929e-07
    %v277 = vmul.f32 %v269, 1.1920929e-07
    %v278 = vmul.f32 %v270, 1.1920929e-07
    %v279 = vmul.f32 %v271, 1.1920929e-07
    %v280 = vmul.f32 %v272, 1.1920929e-07
    %v281 = vsub.f32 %v273, 0.5
    %v282 = vsub.f32 %v274, 0.5
    %v283 = vsub.f32 %v275, 0.5
    %v284 = vsub.f32 %v276, 0.5
    %v285 = vsub.f32 %v277, 0.5
    %v286 = vsub.f32 %v278, 0.5
    %v287 = vsub.f32 %v279, 0.5
    %v288 = vsub.f32 %v280, 0.5
    %v289 = vmul.f32 %v281, %v281
    %v290 = vmul.f32 %v282, %v282
    %v291 = vmul.f32 %v283, %v283
    %v292 = vmul.f32 %v284, %v284
    %v293 = vmul.f32 %v285, %v285
    %v294 = vmul.f32 %v286, %v286
    %v295 = vmul.f32 %v287, %v287
    %v296 = vmul.f32 %v288, %v288
    %v297 = vmul.f32 %v289, -39.69683
    %v298 = vmul.f32 %v290, -39.69683
    %v299 = vmul.f32 %v291, -39.69683
    %v300 = vmul.f32 %v292, -39.69683
    %v301 = vmul.f32 %v293, -39.69683
    %v302 = vmul.f32 %v294, -39.69683
    %v303 = vmul.f32 %v295, -39.69683
    %v304 = vmul.f32 %v296, -39.69683
    %v305 = vadd.f32 %v297, 220.9461
    %v306 = vadd.f32 %v298, 220.9461
    %v307 = vadd.f32 %v299, 220.9461
    %v308 = vadd.f32 %v300, 220.9461
    %v309 = vadd.f32 %v301, 220.9461
    %v310 = vadd.f32 %v302, 220.9461
    %v311 = vadd.f32 %v303, 220.9461
    %v312 = vadd.f32 %v304, 220.9461
    %v313 = vmul.f32 %v305, %v289
    %v314 = vmul.f32 %v306, %v290
    %v315 = vmul.f32 %v307, %v291
    %v316 = vmul.f32 %v308, %v292
    %v317 = vmul.f32 %v309, %v293
    %v318 = vmul.f32 %v310, %v294
    %v319 = vmul.f32 %v311, %v295
    %v320 = vmul.f32 %v312, %v296
    %v321 = vadd.f32 %v313, -275.9285
    %v322 = vadd.f32 %v314, -275.9285
    %v323 = vadd.f32 %v315, -275.9285
    %v324 = vadd.f32 %v316, -275.9285
    %v325 = vadd.f32 %v317, -275.9285
    %v326 = vadd.f32 %v318, -275.9285
    %v327 = vadd.f32 %v319, -275.9285
    %v328 = vadd.f32 %v320, -275.9285
    %v329 = vmul.f32 %v321, %v289
    %v330 = vmul.f32 %v322, %v290
    %v331 = vmul.f32 %v323, %v291
    %v332 = vmul.f32 %v324, %v292
    %v333 = vmul.f32 %v325, %v293
    %v334 = vmul.f32 %v326, %v294
    %v335 = vmul.f32 %v327, %v295
    %v336 = vmul.f32 %v328, %v296
    %v337 = vadd.f32 %v329, 138.35776
    %v338 = vadd.f32 %v330, 138.35776
    %v339 = vadd.f32 %v331, 138.35776
    %v340 = vadd.f32 %v332, 138.35776
    %v341 = vadd.f32 %v333, 138.35776
    %v342 = vadd.f32 %v334, 138.35776
    %v343 = vadd.f32 %v335, 138.35776
    %v344 = vadd.f32 %v336, 138.35776
    %v345 = vmul.f32 %v337, %v289
    %v346 = vmul.f32 %v338, %v290
    %v347 = vmul.f32 %v339, %v291
    %v348 = vmul.f32 %v340, %v292
    %v349 = vmul.f32 %v341, %v293
    %v350 = vmul.f32 %v342, %v294
    %v351 = vmul.f32 %v343, %v295
    %v352 = vmul.f32 %v344, %v296
    %v353 = vadd.f32 %v345, -30.664799
    %v354 = vadd.f32 %v346, -30.664799
    %v355 = vadd.f32 %v347, -30.664799
    %v356 = vadd.f32 %v348, -30.664799
    %v357 = vadd.f32 %v349, -30.664799
    %v358 = vadd.f32 %v350, -30.664799
    %v359 = vadd.f32 %v351, -30.664799
    %v360 = vadd.f32 %v352, -30.664799
    %v361 = vmul.f32 %v353, %v289
    %v362 = vmul.f32 %v354, %v290
    %v363 = vmul.f32 %v355, %v291
    %v364 = vmul.f32 %v356, %v292
    %v365 = vmul.f32 %v357, %v293
    %v366 = vmul.f32 %v358, %v294
    %v367 = vmul.f32 %v359, %v295
    %v368 = vmul.f32 %v360, %v296
    %v369 = vadd.f32 %v361, 2.5066283
    %v370 = vadd.f32 %v362, 2.5066283
    %v371 = vadd.f32 %v363, 2.5066283
    %v372 = vadd.f32 %v364, 2.5066283
    %v373 = vadd.f32 %v365, 2.5066283
    %v374 = vadd.f32 %v366, 2.5066283
    %v375 = vadd.f32 %v367, 2.5066283
    %v376 = vadd.f32 %v368, 2.5066283
    %v377 = vmul.f32 %v369, %v281
    %v378 = vmul.f32 %v370, %v282
    %v379 = vmul.f32 %v371, %v283
    %v380 = vmul.f32 %v372, %v284
    %v381 = vmul.f32 %v373, %v285
    %v382 = vmul.f32 %v374, %v286
    %v383 = vmul.f32 %v375, %v287
    %v384 = vmul.f32 %v376, %v288
    %v385 = vmul.f32 %v289, -54.476097
    %v386 = vmul.f32 %v290, -54.476097
    %v387 = vmul.f32 %v291, -54.476097
    %v388 = vmul.f32 %v292, -54.476097
    %v389 = vmul.f32 %v293, -54.476097
    %v390 = vmul.f32 %v294, -54.476097
    %v391 = vmul.f32 %v295, -54.476097
    %v392 = vmul.f32 %v296, -54.476097
    %v393 = vadd.f32 %v385, 161.58583
    %v394 = vadd.f32 %v386, 161.58583
    %v395 = vadd.f32 %v387, 161.58583
    %v396 = vadd.f32 %v388, 161.58583
    %v397 = vadd.f32 %v389, 161.58583
    %v398 = vadd.f32 %v390, 161.58583
    %v399 = vadd.f32 %v391, 161.58583
    %v400 = vadd.f32 %v392, 161.58583
    %v401 = vmul.f32 %v393, %v289
    %v402 = vmul.f32 %v394, %v290
    %v403 = vmul.f32 %v395, %v291
    %v404 = vmul.f32 %v396, %v292
    %v405 = vmul.f32 %v397, %v293
    %v406 = vmul.f32 %v398, %v294
    %v407 = vmul.f32 %v399, %v295
    %v408 = vmul.f32 %v400, %v296
    %v409 = vadd.f32 %v401, -155.69897
    %v410 = vadd.f32 %v402, -155.69897
    %v411 = vadd.f32 %v403, -155.69897
    %v412 = vadd.f32 %v404, -155.69897
    %v413 = vadd.f32 %v405, -155.69897
    %v414 = vadd.f32 %v406, -155.69897
    %v415 = vadd.f32 %v407, -155.69897
    %v416 = vadd.f32 %v408, -155.69897
    %v417 = vmul.f32 %v409, %v289
    %v418 = vmul.f32 %v410, %v290
    %v419 = vmul.f32 %v411, %v291
    %v420 = vmul.f32 %v412, %v292
    %v421 = vmul.f32 %v413, %v293
    %v422 = vmul.f32 %v414, %v294
    %v423 = vmul.f32 %v415, %v295
    %v424 = vmul.f32 %v416, %v296
    %v425 = vadd.f32 %v417, 66.801315
    %v426 = vadd.f32 %v418, 66.801315
    %v427 = vadd.f32 %v419, 66.801315
    %v428 = vadd.f32 %v420, 66.801315
    %v429 = vadd.f32 %v421, 66.801315
    %v430 = vadd.f32 %v422, 66.801315
    %v431 = vadd.f32 %v423, 66.801315
    %v432 = vadd.f32 %v424, 66.801315
    %v433 = vmul.f32 %v425, %v289
    %v434 = vmul.f32 %v426, %v290
    %v435 = vmul.f32 %v427, %v291
    %v436 = vmul.f32 %v428, %v292
    %v437 = vmul.f32 %v429, %v293
    %v438 = vmul.f32 %v430, %v294
    %v439 = vmul.f32 %v431, %v295
    %v440 = vmul.f32 %v432, %v296
    %v441 = vadd.f32 %v433, -13.280682
    %v442 = vadd.f32 %v434, -13.280682
    %v443 = vadd.f32 %v435, -13.280682
    %v444 = vadd.f32 %v436, -13.280682
    %v445 = vadd.f32 %v437, -13.280682
    %v446 = vadd.f32 %v438, -13.280682
    %v447 = vadd.f32 %v439, -13.280682
    %v448 = vadd.f32 %v440, -13.280682
    %v449 = vmul.f32 %v441, %v289
    %v450 = vmul.f32 %v442, %v290
    %v451 = vmul.f32 %v443, %v291
    %v452 = vmul.f32 %v444, %v292
    %v453 = vmul.f32 %v445, %v293
    %v454 = vmul.f32 %v446, %v294
    %v455 = vmul.f32 %v447, %v295
    %v456 = vmul.f32 %v448, %v296
    %v457 = vadd.f32 %v449, 1.0
    %v458 = vadd.f32 %v450, 1.0
    %v459 = vadd.f32 %v451, 1.0
    %v460 = vadd.f32 %v452, 1.0
    %v461 = vadd.f32 %v453, 1.0
    %v462 = vadd.f32 %v454, 1.0
    %v463 = vadd.f32 %v455, 1.0
    %v464 = vadd.f32 %v456, 1.0
    %v465 = vsub.f32 1.0, %v273
    %v466 = vsub.f32 1.0, %v274
    %v467 = vsub.f32 1.0, %v275
    %v468 = vsub.f32 1.0, %v276
    %v469 = vsub.f32 1.0, %v277
    %v470 = vsub.f32 1.0, %v278
    %v471 = vsub.f32 1.0, %v279
    %v472 = vsub.f32 1.0, %v280
    %v473 = vmin.f32 %v273, %v465
    %v474 = vmin.f32 %v274, %v466
    %v475 = vmin.f32 %v275, %v467
    %v476 = vmin.f32 %v276, %v468
    %v477 = vmin.f32 %v277, %v469
    %v478 = vmin.f32 %v278, %v470
    %v479 = vmin.f32 %v279, %v471
    %v480 = vmin.f32 %v280, %v472
    %v481 = vlog2.pop %v473
    %v482 = vmul.f32 %v481, 0.6931472
    %v483 = vlog2.pop %v474
    %v484 = vmul.f32 %v483, 0.6931472
    %v485 = vlog2.pop %v475
    %v486 = vmul.f32 %v485, 0.6931472
    %v487 = vlog2.pop %v476
    %v488 = vmul.f32 %v487, 0.6931472
    %v489 = vlog2.pop %v477
    %v490 = vmul.f32 %v489, 0.6931472
    %v491 = vlog2.pop %v478
    %v492 = vmul.f32 %v491, 0.6931472
    %v493 = vlog2.pop %v479
    %v494 = vmul.f32 %v493, 0.6931472
    %v495 = vlog2.pop %v480
    %v496 = vmul.f32 %v495, 0.6931472
    %v497 = vmul.f32 %v482, -2.0
    %v498 = vmul.f32 %v484, -2.0
    %v499 = vmul.f32 %v486, -2.0
    %v500 = vmul.f32 %v488, -2.0
    %v501 = vmul.f32 %v490, -2.0
    %v502 = vmul.f32 %v492, -2.0
    %v503 = vmul.f32 %v494, -2.0
    %v504 = vmul.f32 %v496, -2.0
    %v505 = vrsqrt.pop %v497
    %v506 = vmul.f32 %v497, %v505
    %vm507 = vcmp.eq.f32.partialorder %v497, inf
    %v508 = vsel %vm507, %v497, %v506
    %vm509 = vcmp.eq.f32.partialorder %v497, 0.0
    %v510 = vand.u32 %v497, 2147483648
    %v511 = vsel %vm509, %v510, %v508
    %v512 = vrsqrt.pop %v498
    %v513 = vmul.f32 %v498, %v512
    %vm514 = vcmp.eq.f32.partialorder %v498, inf
    %v515 = vsel %vm514, %v498, %v513
    %vm516 = vcmp.eq.f32.partialorder %v498, 0.0
    %v517 = vand.u32 %v498, 2147483648
    %v518 = vsel %vm516, %v517, %v515
    %v519 = vrsqrt.pop %v499
    %v520 = vmul.f32 %v499, %v519
    %vm521 = vcmp.eq.f32.partialorder %v499, inf
    %v522 = vsel %vm521, %v499, %v520
    %vm523 = vcmp.eq.f32.partialorder %v499, 0.0
    %v524 = vand.u32 %v499, 2147483648
    %v525 = vsel %vm523, %v524, %v522
    %v526 = vrsqrt.pop %v500
    %v527 = vmul.f32 %v500, %v526
    %vm528 = vcmp.eq.f32.partialorder %v500, inf
    %v529 = vsel %vm528, %v500, %v527
    %vm530 = vcmp.eq.f32.partialorder %v500, 0.0
    %v531 = vand.u32 %v500, 2147483648
    %v532 = vsel %vm530, %v531, %v529
    %v533 = vrsqrt.pop %v501
    %v534 = vmul.f32 %v501, %v533
    %vm535 = vcmp.eq.f32.partialorder %v501, inf
    %v536 = vsel %vm535, %v501, %v534
    %vm537 = vcmp.eq.f32.partialorder %v501, 0.0
    %v538 = vand.u32 %v501, 2147483648
    %v539 = vsel %vm537, %v538, %v536
    %v540 = vrsqrt.pop %v502
    %v541 = vmul.f32 %v502, %v540
    %vm542 = vcmp.eq.f32.partialorder %v502, inf
    %v543 = vsel %vm542, %v502, %v541
    %vm544 = vcmp.eq.f32.partialorder %v502, 0.0
    %v545 = vand.u32 %v502, 2147483648
    %v546 = vsel %vm544, %v545, %v543
    %v547 = vrsqrt.pop %v503
    %v548 = vmul.f32 %v503, %v547
    %vm549 = vcmp.eq.f32.partialorder %v503, inf
    %v550 = vsel %vm549, %v503, %v548
    %vm551 = vcmp.eq.f32.partialorder %v503, 0.0
    %v552 = vand.u32 %v503, 2147483648
    %v553 = vsel %vm551, %v552, %v550
    %v554 = vrsqrt.pop %v504
    %v555 = vmul.f32 %v504, %v554
    %vm556 = vcmp.eq.f32.partialorder %v504, inf
    %v557 = vsel %vm556, %v504, %v555
    %vm558 = vcmp.eq.f32.partialorder %v504, 0.0
    %v559 = vand.u32 %v504, 2147483648
    %v560 = vsel %vm558, %v559, %v557
    %v561 = vmul.f32 %v511, -0.007784894
    %v562 = vmul.f32 %v518, -0.007784894
    %v563 = vmul.f32 %v525, -0.007784894
    %v564 = vmul.f32 %v532, -0.007784894
    %v565 = vmul.f32 %v539, -0.007784894
    %v566 = vmul.f32 %v546, -0.007784894
    %v567 = vmul.f32 %v553, -0.007784894
    %v568 = vmul.f32 %v560, -0.007784894
    %v569 = vadd.f32 %v561, -0.32239646
    %v570 = vadd.f32 %v562, -0.32239646
    %v571 = vadd.f32 %v563, -0.32239646
    %v572 = vadd.f32 %v564, -0.32239646
    %v573 = vadd.f32 %v565, -0.32239646
    %v574 = vadd.f32 %v566, -0.32239646
    %v575 = vadd.f32 %v567, -0.32239646
    %v576 = vadd.f32 %v568, -0.32239646
    %v577 = vmul.f32 %v569, %v511
    %v578 = vmul.f32 %v570, %v518
    %v579 = vmul.f32 %v571, %v525
    %v580 = vmul.f32 %v572, %v532
    %v581 = vmul.f32 %v573, %v539
    %v582 = vmul.f32 %v574, %v546
    %v583 = vmul.f32 %v575, %v553
    %v584 = vmul.f32 %v576, %v560
    %v585 = vadd.f32 %v577, -2.4007583
    %v586 = vadd.f32 %v578, -2.4007583
    %v587 = vadd.f32 %v579, -2.4007583
    %v588 = vadd.f32 %v580, -2.4007583
    %v589 = vadd.f32 %v581, -2.4007583
    %v590 = vadd.f32 %v582, -2.4007583
    %v591 = vadd.f32 %v583, -2.4007583
    %v592 = vadd.f32 %v584, -2.4007583
    %v593 = vmul.f32 %v585, %v511
    %v594 = vmul.f32 %v586, %v518
    %v595 = vmul.f32 %v587, %v525
    %v596 = vmul.f32 %v588, %v532
    %v597 = vmul.f32 %v589, %v539
    %v598 = vmul.f32 %v590, %v546
    %v599 = vmul.f32 %v591, %v553
    %v600 = vmul.f32 %v592, %v560
    %v601 = vadd.f32 %v593, -2.5497324
    %v602 = vadd.f32 %v594, -2.5497324
    %v603 = vadd.f32 %v595, -2.5497324
    %v604 = vadd.f32 %v596, -2.5497324
    %v605 = vadd.f32 %v597, -2.5497324
    %v606 = vadd.f32 %v598, -2.5497324
    %v607 = vadd.f32 %v599, -2.5497324
    %v608 = vadd.f32 %v600, -2.5497324
    %v609 = vmul.f32 %v601, %v511
    %v610 = vmul.f32 %v602, %v518
    %v611 = vmul.f32 %v603, %v525
    %v612 = vmul.f32 %v604, %v532
    %v613 = vmul.f32 %v605, %v539
    %v614 = vmul.f32 %v606, %v546
    %v615 = vmul.f32 %v607, %v553
    %v616 = vmul.f32 %v608, %v560
    %v617 = vadd.f32 %v609, 4.3746643
    %v618 = vadd.f32 %v610, 4.3746643
    %v619 = vadd.f32 %v611, 4.3746643
    %v620 = vadd.f32 %v612, 4.3746643
    %v621 = vadd.f32 %v613, 4.3746643
    %v622 = vadd.f32 %v614, 4.3746643
    %v623 = vadd.f32 %v615, 4.3746643
    %v624 = vadd.f32 %v616, 4.3746643
    %v625 = vmul.f32 %v617, %v511
    %v626 = vmul.f32 %v618, %v518
    %v627 = vmul.f32 %v619, %v525
    %v628 = vmul.f32 %v620, %v532
    %v629 = vmul.f32 %v621, %v539
    %v630 = vmul.f32 %v622, %v546
    %v631 = vmul.f32 %v623, %v553
    %v632 = vmul.f32 %v624, %v560
    %v633 = vadd.f32 %v625, 2.938164
    %v634 = vadd.f32 %v626, 2.938164
    %v635 = vadd.f32 %v627, 2.938164
    %v636 = vadd.f32 %v628, 2.938164
    %v637 = vadd.f32 %v629, 2.938164
    %v638 = vadd.f32 %v630, 2.938164
    %v639 = vadd.f32 %v631, 2.938164
    %v640 = vadd.f32 %v632, 2.938164
    %v641 = vmul.f32 %v511, 0.007784696
    %v642 = vmul.f32 %v518, 0.007784696
    %v643 = vmul.f32 %v525, 0.007784696
    %v644 = vmul.f32 %v532, 0.007784696
    %v645 = vmul.f32 %v539, 0.007784696
    %v646 = vmul.f32 %v546, 0.007784696
    %v647 = vmul.f32 %v553, 0.007784696
    %v648 = vmul.f32 %v560, 0.007784696
    %v649 = vadd.f32 %v641, 0.32246712
    %v650 = vadd.f32 %v642, 0.32246712
    %v651 = vadd.f32 %v643, 0.32246712
    %v652 = vadd.f32 %v644, 0.32246712
    %v653 = vadd.f32 %v645, 0.32246712
    %v654 = vadd.f32 %v646, 0.32246712
    %v655 = vadd.f32 %v647, 0.32246712
    %v656 = vadd.f32 %v648, 0.32246712
    %v657 = vmul.f32 %v649, %v511
    %v658 = vmul.f32 %v650, %v518
    %v659 = vmul.f32 %v651, %v525
    %v660 = vmul.f32 %v652, %v532
    %v661 = vmul.f32 %v653, %v539
    %v662 = vmul.f32 %v654, %v546
    %v663 = vmul.f32 %v655, %v553
    %v664 = vmul.f32 %v656, %v560
    %v665 = vadd.f32 %v657, 2.4451342
    %v666 = vadd.f32 %v658, 2.4451342
    %v667 = vadd.f32 %v659, 2.4451342
    %v668 = vadd.f32 %v660, 2.4451342
    %v669 = vadd.f32 %v661, 2.4451342
    %v670 = vadd.f32 %v662, 2.4451342
    %v671 = vadd.f32 %v663, 2.4451342
    %v672 = vadd.f32 %v664, 2.4451342
    %v673 = vmul.f32 %v665, %v511
    %v674 = vmul.f32 %v666, %v518
    %v675 = vmul.f32 %v667, %v525
    %v676 = vmul.f32 %v668, %v532
    %v677 = vmul.f32 %v669, %v539
    %v678 = vmul.f32 %v670, %v546
    %v679 = vmul.f32 %v671, %v553
    %v680 = vmul.f32 %v672, %v560
    %v681 = vadd.f32 %v673, 3.7544086
    %v682 = vadd.f32 %v674, 3.7544086
    %v683 = vadd.f32 %v675, 3.7544086
    %v684 = vadd.f32 %v676, 3.7544086
    %v685 = vadd.f32 %v677, 3.7544086
    %v686 = vadd.f32 %v678, 3.7544086
    %v687 = vadd.f32 %v679, 3.7544086
    %v688 = vadd.f32 %v680, 3.7544086
    %v689 = vmul.f32 %v681, %v511
    %v690 = vmul.f32 %v682, %v518
    %v691 = vmul.f32 %v683, %v525
    %v692 = vmul.f32 %v684, %v532
    %v693 = vmul.f32 %v685, %v539
    %v694 = vmul.f32 %v686, %v546
    %v695 = vmul.f32 %v687, %v553
    %v696 = vmul.f32 %v688, %v560
    %v697 = vadd.f32 %v689, 1.0
    %v698 = vadd.f32 %v690, 1.0
    %v699 = vadd.f32 %v691, 1.0
    %v700 = vadd.f32 %v692, 1.0
    %v701 = vadd.f32 %v693, 1.0
    %v702 = vadd.f32 %v694, 1.0
    %v703 = vadd.f32 %v695, 1.0
    %v704 = vadd.f32 %v696, 1.0
    %vm705 = vcmp.lt.f32.partialorder %v281, 0.0
    %vm706 = vcmp.lt.f32.partialorder %v282, 0.0
    %vm707 = vcmp.lt.f32.partialorder %v283, 0.0
    %vm708 = vcmp.lt.f32.partialorder %v284, 0.0
    %vm709 = vcmp.lt.f32.partialorder %v285, 0.0
    %vm710 = vcmp.lt.f32.partialorder %v286, 0.0
    %vm711 = vcmp.lt.f32.partialorder %v287, 0.0
    %vm712 = vcmp.lt.f32.partialorder %v288, 0.0
    %v713 = vsub.f32 0.0, %v633
    %v714 = vsub.f32 0.0, %v634
    %v715 = vsub.f32 0.0, %v635
    %v716 = vsub.f32 0.0, %v636
    %v717 = vsub.f32 0.0, %v637
    %v718 = vsub.f32 0.0, %v638
    %v719 = vsub.f32 0.0, %v639
    %v720 = vsub.f32 0.0, %v640
    %v721 = vsel %vm705, %v633, %v713
    %v722 = vsel %vm706, %v634, %v714
    %v723 = vsel %vm707, %v635, %v715
    %v724 = vsel %vm708, %v636, %v716
    %v725 = vsel %vm709, %v637, %v717
    %v726 = vsel %vm710, %v638, %v718
    %v727 = vsel %vm711, %v639, %v719
    %v728 = vsel %vm712, %v640, %v720
    %vm729 = vcmp.lt.f32.partialorder %v473, 0.02425
    %vm730 = vcmp.lt.f32.partialorder %v474, 0.02425
    %vm731 = vcmp.lt.f32.partialorder %v475, 0.02425
    %vm732 = vcmp.lt.f32.partialorder %v476, 0.02425
    %vm733 = vcmp.lt.f32.partialorder %v477, 0.02425
    %vm734 = vcmp.lt.f32.partialorder %v478, 0.02425
    %vm735 = vcmp.lt.f32.partialorder %v479, 0.02425
    %vm736 = vcmp.lt.f32.partialorder %v480, 0.02425
    %v737 = vsel %vm729, %v721, %v377
    %v738 = vsel %vm730, %v722, %v378
    %v739 = vsel %vm731, %v723, %v379
    %v740 = vsel %vm732, %v724, %v380
    %v741 = vsel %vm733, %v725, %v381
    %v742 = vsel %vm734, %v726, %v382
    %v743 = vsel %vm735, %v727, %v383
    %v744 = vsel %vm736, %v728, %v384
    %v745 = vsel %vm729, %v697, %v457
    %v746 = vsel %vm730, %v698, %v458
    %v747 = vsel %vm731, %v699, %v459
    %v748 = vsel %vm732, %v700, %v460
    %v749 = vsel %vm733, %v701, %v461
    %v750 = vsel %vm734, %v702, %v462
    %v751 = vsel %vm735, %v703, %v463
    %v752 = vsel %vm736, %v704, %v464
    %v753 = vrcp.pop %v745
    %v754 = vmul.f32 %v737, %v753
    %v755 = vrcp.pop %v746
    %v756 = vmul.f32 %v738, %v755
    %v757 = vrcp.pop %v747
    %v758 = vmul.f32 %v739, %v757
    %v759 = vrcp.pop %v748
    %v760 = vmul.f32 %v740, %v759
    %v761 = vrcp.pop %v749
    %v762 = vmul.f32 %v741, %v761
    %v763 = vrcp.pop %v750
    %v764 = vmul.f32 %v742, %v763
    %v765 = vrcp.pop %v751
    %v766 = vmul.f32 %v743, %v765
    %v767 = vrcp.pop %v752
    %v768 = vmul.f32 %v744, %v767
    %v769 = vld [vmem:[#allocation4] sm:$0xff]
    %v770 = vld [vmem:[#allocation4 + $0x8] sm:$0xff]
    %v771 = vld [vmem:[#allocation4 + $0x10] sm:$0xff]
    %v772 = vld [vmem:[#allocation4 + $0x18] sm:$0xff]
    %v773 = vld [vmem:[#allocation4 + $0x20] sm:$0xff]
    %v774 = vld [vmem:[#allocation4 + $0x28] sm:$0xff]
    %v775 = vld [vmem:[#allocation4 + $0x30] sm:$0xff]
    %v776 = vld [vmem:[#allocation4 + $0x38] sm:$0xff]
    %v777 = vmul.f32 %v754, 0.1
    %v778 = vmul.f32 %v756, 0.1
    %v779 = vmul.f32 %v758, 0.1
    %v780 = vmul.f32 %v760, 0.1
    %v781 = vmul.f32 %v762, 0.1
    %v782 = vmul.f32 %v764, 0.1
    %v783 = vmul.f32 %v766, 0.1
    %v784 = vmul.f32 %v768, 0.1
    %v785 = vadd.f32 %v777, 1.0
    %v786 = vadd.f32 %v778, 1.0
    %v787 = vadd.f32 %v779, 1.0
    %v788 = vadd.f32 %v780, 1.0
    %v789 = vadd.f32 %v781, 1.0
    %v790 = vadd.f32 %v782, 1.0
    %v791 = vadd.f32 %v783, 1.0
    %v792 = vadd.f32 %v784, 1.0
    %v793 = vmul.f32 %v769, %v785
    %v794 = vmul.f32 %v770, %v786
    %v795 = vmul.f32 %v771, %v787
    %v796 = vmul.f32 %v772, %v788
    %v797 = vmul.f32 %v773, %v789
    %v798 = vmul.f32 %v774, %v790
    %v799 = vmul.f32 %v775, %v791
    %v800 = vmul.f32 %v776, %v792
    %v801 = vmax.f32 %v793, 0.0
    %v802 = vmax.f32 %v794, 0.0
    %v803 = vmax.f32 %v795, 0.0
    %v804 = vmax.f32 %v796, 0.0
    %v805 = vmax.f32 %v797, 0.0
    %v806 = vmax.f32 %v798, 0.0
    %v807 = vmax.f32 %v799, 0.0
    %v808 = vmax.f32 %v800, 0.0
    %v809 = vmin.f32 %v801, 1.0
    %v810 = vmin.f32 %v802, 1.0
    %v811 = vmin.f32 %v803, 1.0
    %v812 = vmin.f32 %v804, 1.0
    %v813 = vmin.f32 %v805, 1.0
    %v814 = vmin.f32 %v806, 1.0
    %v815 = vmin.f32 %v807, 1.0
    %v816 = vmin.f32 %v808, 1.0
    %817 = vst [vmem:[#allocation7] sm:$0xff] %v809
    %818 = vst [vmem:[#allocation7 + $0x8] sm:$0xff] %v810
    %819 = vst [vmem:[#allocation7 + $0x10] sm:$0xff] %v811
    %820 = vst [vmem:[#allocation7 + $0x18] sm:$0xff] %v812
    %821 = vst [vmem:[#allocation7 + $0x20] sm:$0xff] %v813
    %822 = vst [vmem:[#allocation7 + $0x28] sm:$0xff] %v814
    %823 = vst [vmem:[#allocation7 + $0x30] sm:$0xff] %v815
    %824 = vst [vmem:[#allocation7 + $0x38] sm:$0xff] %v816
    // Predicated region
    $region10: #{tpu_custom_call.1} parent=1 // pred_check
      _
    $region11: #{tpu_custom_call.1} parent=1 // pred_check_branch
      %826 = sbr.rel (0) target = $region13
    $region12: #{tpu_custom_call.1} parent=1 // pred_region
      %s828 = ssub.s32 1024, 1024
      %829 = vsyncadd [#allocation6], %s828
      %s831 = sshll.u32 [#allocation7], 4
      %s832 = int_to_ptr.vmem [resolvable:$true] %s831
      %834 = dma.vmem_to_hbm [thread:$0]  %s832, 1024, %s2, [#allocation6]
    $region13: #{tpu_custom_call.1} parent=1 // pred_fallthru
      _
    // Predicated region
    $region14: #{tpu_custom_call.1} parent=1 // pred_check
      _
    $region15: #{tpu_custom_call.1} parent=1 // pred_check_branch
      %836 = sbr.rel (0) target = $region17
    $region16: #{tpu_custom_call.1} parent=1 // pred_region
      %837 = dma.done [#allocation6], 1024
    $region17: #{tpu_custom_call.1} parent=1 // pred_fallthru
      _
    %838 = vsyncpa [#allocation5], 1
    %839 = vsyncpa [#allocation6], 1

</llo_original>
